<compile_context>
chip_gen: v7x
topology: tpu7x:2x2x1
jax: 0.10.0
libtpu: 0.0.40
codegen_flags: <defaults>
</compile_context>

<pallas_src>
import functools

import numpy as np

import jax
import jax.numpy as jnp
from jax import lax
from jax.experimental import pallas as pl
from jax.experimental.pallas import tpu as pltpu


# ----------------------------------------------------------------------------- helpers
def _round_up(v, m):
    return ((v + m - 1) // m) * m


def _vmem_capacity_bytes():
    """Per-core VMEM capacity; fall back to the v7x value (the smallest)."""
    try:
        return int(pltpu.get_tpu_info().vmem_capacity_bytes)
    except Exception:
        return 64 * 1024 * 1024


def _choose_lane_tile(HW, max_lanes):
    """For HW > max_lanes: pick (tile, padded_hw) with tile a multiple of 128 that
    divides padded_hw, preferring a large tile with <= ~6% padding overhead."""
    max_k = max(1, max_lanes // 128)
    hw128 = _round_up(HW, 128)
    allow = hw128 + (hw128 // 16 // 128) * 128   # ~6% padding allowance
    for k in range(max_k, 0, -1):
        t = 128 * k
        padded = _round_up(HW, t)
        if padded <= allow:
            return t, padded
    return 128, hw128


def _band_matrix(R, C, local_size):
    """(R, R) 0/1 band: band[r, r'] = 1 iff r,r' are in the same batch group of C
    rows and (r' - r) lies in the LRN window.  Built once on the host (tiny)."""
    pad = (local_size - 1) // 2
    r = np.arange(R)
    d = r[None, :] - r[:, None]                       # r' - r
    same = (r[:, None] // C) == (r[None, :] // C)     # same batch element
    win = (d >= -pad) & (d <= local_size - 1 - pad)
    return jnp.asarray((same & win).astype(np.float32))


def _inv_pow(base, beta):
    """base ** (-beta) for base >= 1, without a divide."""
    if beta == 0.75:
        r = lax.rsqrt(base)                 # base^-0.5
        return r * jnp.sqrt(r)              # base^-0.75
    if beta == 0.5:
        return lax.rsqrt(base)
    return jnp.exp(-beta * jnp.log(base))   # general: one log + one exp (EUP)


# ----------------------------------------------------------------------------- kernels
def _lrn_kernel_band(band_ref, x_ref, o_ref, *, local_size, alpha, beta):
    """Window sum on the MXU: acc = band @ sq (band is a static 0/1 banded matrix)."""
    sq = jnp.square(x_ref[...].astype(jnp.float32))
    acc = lax.dot_general(
        band_ref[...], sq, (((1,), (0,)), ((), ())),
        preferred_element_type=jnp.float32)
    base = acc * (alpha / local_size) + 1.0
    inv = _inv_pow(base, beta)
    # Re-read x from the VMEM block (cheap vld) instead of keeping an f32 copy live.
    o_ref[...] = (x_ref[...].astype(jnp.float32) * inv).astype(o_ref.dtype)


def _lrn_kernel_roll(x_ref, o_ref, *, C, local_size, alpha, beta):
    """Fallback window sum: per-tap sublane roll (XLU) + broadcast (R,1) mask."""
    sq = jnp.square(x_ref[...].astype(jnp.float32))
    R = x_ref.shape[0]

    acc = sq                                           # centre tap
    if local_size > 1:
        pad = (local_size - 1) // 2
        # channel index of each merged (N*C) row; blocks are batch-aligned so this
        # is just (row % C); shape (R,1) so the select broadcasts along lanes.
        ch = lax.broadcasted_iota(jnp.int32, (R, 1), 0) % C
        for k in range(local_size):
            off = k - pad
            if off == 0:
                continue
            shifted = pltpu.roll(sq, shift=(-off) % R, axis=0)
            # one comparison per tap (the other bound is always true)
            valid = (ch < C - off) if off > 0 else (ch >= -off)
            acc = acc + jnp.where(valid, shifted, 0.0)

    base = acc * (alpha / local_size) + 1.0
    inv = _inv_pow(base, beta)
    o_ref[...] = (x_ref[...].astype(jnp.float32) * inv).astype(o_ref.dtype)


# ----------------------------------------------------------------------------- wrapper
def lrn_pallas(x, local_size=1, alpha=1.0, beta=0.75):
    """x: (N, C, H, W). ACROSS_CHANNELS LRN matching the PyTorch module."""
    N, C, H, W = x.shape
    HW = H * W
    R_total = N * C
    itemsize = x.dtype.itemsize

    # ---- VMEM budget & per-block element target ------------------------------------
    vmem_cap = _vmem_capacity_bytes()                              # 64 MiB on v7x
    budget = max(min(vmem_cap, 128 * 1024 * 1024) - 20 * 1024 * 1024,
                 16 * 1024 * 1024)
    # 2x double-buffered in/out blocks (input dtype) + ~6 live f32 block temporaries
    per_elem = 4 * itemsize + 6 * 4
    max_elems = min(budget // per_elem, 2 * 1024 * 1024)           # cap ~8 MiB f32 slab

    # ---- row (merged N*C) block: batch-aligned and sublane-legal --------------------
    divisors = [nb for nb in range(1, N + 1) if N % nb == 0]
    legal = [nb for nb in divisors if (nb * C) % 8 == 0 or nb == N]
    nb_min = min(legal)

    # ---- lane tile -------------------------------------------------------------------
    max_lanes = max(128, (max_elems // (nb_min * C)) // 128 * 128)
    if HW <= max_lanes:
        TILE, HW_pad = HW, HW          # full-extent last dim: no pad, no slice
    else:
        TILE, HW_pad = _choose_lane_tile(HW, max_lanes)

    # ---- grow rows per block while the slab still fits (helps small-HW shapes) ------
    NB = nb_min
    for nb in sorted(legal, reverse=True):
        if nb * C <= 512 and nb * C * TILE <= max_elems:
            NB = nb
            break
    R_block = NB * C

    n_row_blocks = R_total // R_block
    n_lane_blocks = HW_pad // TILE

    # ---- make sure big problems expose >= 2 grid steps (2 TensorCores on v7x) -------
    if n_row_blocks * n_lane_blocks == 1 and R_total * HW >= (1 << 18):
        if TILE % 256 == 0:
            TILE //= 2
        else:
            smaller = [nb for nb in legal if nb < NB and (nb * C) % 8 == 0]
            if smaller:
                NB = max(smaller)
                R_block = NB * C
        n_row_blocks = R_total // R_block
        n_lane_blocks = HW_pad // TILE

    # ---- choose window implementation ------------------------------------------------
    use_band = (local_size > 1 and TILE % 128 == 0 and R_block % 8 == 0
                and R_block <= 1024)

    # ---- prepare input (fold N into the channel axis) --------------------------------
    x2 = x.reshape(R_total, HW)
    if HW_pad != HW:
        # Pad only to the chosen 128-multiple tile grid (zero lanes -> exact zeros out).
        x2 = jnp.pad(x2, ((0, 0), (0, HW_pad - HW)))

    vmem_limit = int(min(vmem_cap - 2 * 1024 * 1024, 100 * 1024 * 1024))

    if use_band:
        band = _band_matrix(R_block, C, int(local_size))
        in_specs = [
            pl.BlockSpec((R_block, R_block), lambda i, j: (0, 0)),
            pl.BlockSpec((R_block, TILE), lambda i, j: (i, j)),
        ]
        args = (band, x2)
        kernel = functools.partial(
            _lrn_kernel_band,
            local_size=int(local_size), alpha=float(alpha), beta=float(beta))
    else:
        in_specs = [pl.BlockSpec((R_block, TILE), lambda i, j: (i, j))]
        args = (x2,)
        kernel = functools.partial(
            _lrn_kernel_roll,
            C=int(C), local_size=int(local_size), alpha=float(alpha), beta=float(beta))

    out = pl.pallas_call(
        kernel,
        out_shape=jax.ShapeDtypeStruct((R_total, HW_pad), x.dtype),
        grid_spec=pltpu.PrefetchScalarGridSpec(
            num_scalar_prefetch=0,
            grid=(n_row_blocks, n_lane_blocks),
            in_specs=in_specs,
            out_specs=pl.BlockSpec((R_block, TILE), lambda i, j: (i, j)),
        ),
        compiler_params=pltpu.CompilerParams(
            dimension_semantics=("parallel", "parallel"),
            vmem_limit_bytes=vmem_limit,
        ),
    )(*args)

    if HW_pad != HW:
        out = out[:, :HW]
    return out.reshape(N, C, H, W)


# ----------------------------------------------------------------------------- reference
def lrn_reference(x, local_size=1, alpha=1.0, beta=0.75):
    """Pure-JAX reference mirroring AvgPool3d((local_size,1,1), stride=1,
    padding=((local_size-1)//2,0,0), count_include_pad=True)."""
    N, C, H, W = x.shape
    pad = (local_size - 1) // 2
    sq = (x.astype(jnp.float32)) ** 2
    sq_p = jnp.pad(sq, ((0, 0), (pad, pad), (0, 0), (0, 0)))
    acc = jnp.zeros_like(sq)
    for k in range(local_size):
        acc = acc + sq_p[:, k:k + C, :, :]
    div = acc / local_size
    div = (div * alpha + 1.0) ** beta
    return (x.astype(jnp.float32) / div).astype(x.dtype)


if __name__ == "__main__":
    key = jax.random.PRNGKey(0)
    k1, k2 = jax.random.split(key)

    # Default module config (local_size=1, alpha=1.0, beta=0.75).
    x = jax.random.normal(k1, (2, 4, 16, 16), dtype=jnp.float32)
    out1 = jax.block_until_ready(lrn_pallas(x, local_size=1, alpha=1.0, beta=0.75))
    ref1 = lrn_reference(x, local_size=1, alpha=1.0, beta=0.75)
    assert jnp.allclose(out1, ref1, atol=2e-5, rtol=2e-5)

    # Cross-channel window > 1 on 128-aligned HW (exercises the MXU band path).
    out3 = jax.block_until_ready(lrn_pallas(x, local_size=3, alpha=1e-4, beta=0.75))
    ref3 = lrn_reference(x, local_size=3, alpha=1e-4, beta=0.75)
    assert jnp.allclose(out3, ref3, atol=2e-5, rtol=2e-5)

    # Unaligned HW + odd channel count + non-default beta: full-extent lane block
    # (no pad/slice) and the roll+mask fallback path.
    y = jax.random.normal(k2, (2, 6, 10, 13), dtype=jnp.float32)
    out5 = jax.block_until_ready(lrn_pallas(y, local_size=5, alpha=2e-4, beta=0.5))
    ref5 = lrn_reference(y, local_size=5, alpha=2e-4, beta=0.5)
    assert jnp.allclose(out5, ref5, atol=2e-5, rtol=2e-5)

    print("KERNEL_OK")
</pallas_src>

<mosaic_0001>
module attributes {stable_mosaic.version = 11 : i64} {
  func.func @_lrn_kernel_roll(%arg0: i32, %arg1: i32, %arg2: memref<8x256xf32, #tpu.memory_space<vmem>>, %arg3: memref<8x256xf32, #tpu.memory_space<vmem>>) attributes {dimension_semantics = [#tpu.dimension_semantics<parallel>, #tpu.dimension_semantics<parallel>], iteration_bounds = array<i64: 1, 1>, scalar_prefetch = 0 : i64, scratch_operands = 0 : i64, tpu.core_type = #tpu.core_type<tc>, window_params = [{transform_indices = @transform_0, window_bounds = array<i64: 8, 256>}, {transform_indices = @transform_1, window_bounds = array<i64: 8, 256>}]} {
    %c0 = arith.constant 0 : index
    %c0_0 = arith.constant 0 : index
    %0 = vector.load %arg2[%c0, %c0_0] : memref<8x256xf32, #tpu.memory_space<vmem>>, vector<8x256xf32>
    %1 = arith.mulf %0, %0 : vector<8x256xf32>
    %cst = arith.constant 1.000000e+00 : f32
    %2 = vector.broadcast %cst : f32 to vector<8x256xf32>
    %3 = arith.mulf %1, %2 : vector<8x256xf32>
    %cst_1 = arith.constant 1.000000e+00 : f32
    %4 = vector.broadcast %cst_1 : f32 to vector<8x256xf32>
    %5 = arith.addf %3, %4 : vector<8x256xf32>
    %6 = math.rsqrt %5 : vector<8x256xf32>
    %7 = math.sqrt %6 : vector<8x256xf32>
    %8 = arith.mulf %6, %7 : vector<8x256xf32>
    %c0_2 = arith.constant 0 : index
    %c0_3 = arith.constant 0 : index
    %9 = vector.load %arg2[%c0_2, %c0_3] : memref<8x256xf32, #tpu.memory_space<vmem>>, vector<8x256xf32>
    %10 = arith.mulf %9, %8 : vector<8x256xf32>
    %c0_4 = arith.constant 0 : index
    %c0_5 = arith.constant 0 : index
    %11 = vector.load %arg3[%c0_4, %c0_5] : memref<8x256xf32, #tpu.memory_space<vmem>>, vector<8x256xf32>
    tpu.vector_store %arg3[%c0_4, %c0_5], %10 {strides = array<i32>} : memref<8x256xf32, #tpu.memory_space<vmem>>, vector<8x256xf32>,
    return
  }
  func.func @transform_0(%arg0: i32, %arg1: i32) -> (i32, i32) {
    %c0_i32 = arith.constant 0 : i32
    return %arg0, %arg1 : i32, i32
  }
  func.func @transform_1(%arg0: i32, %arg1: i32) -> (i32, i32) {
    %c0_i32 = arith.constant 0 : i32
    return %arg0, %arg1 : i32, i32
  }
}

</mosaic_0001>

<llo_original>
// kernel: tpu_custom_call.1
$region0: #{tpu_custom_call.1}
  #allocation0 [shape = 'u32[]', space=smem, size = 0x4, offset = 0x4, fixed_abs, tag = 'smem constant byte address 0x4 - core index']
  #allocation1 [shape = 'u32[144,128]{1,0:T(1,128)}', space=vmem, size = 0x12000, scoped, tag = 'internal scratch']
  %s0 = inlined_call_operand.hbm [shape: f32[8,256], index: 0, kind: input, shape index: {}]
  %s1 = inlined_call_operand.hbm [shape: f32[8,256], index: 1, kind: output, shape index: {}]
  %s2 = sld [smem:[#allocation0]]
  $region18: #{tpu_custom_call.1} parent=0
    _
  %s4 = ssub.s32 1, %s2
  %s5 = scalar_select 0, %s4, %s2
  $region1: #{tpu_custom_call.1} parent=0
    #allocation2 [shape = 'u8[8192]{0}', space=vmem, size = 0x2000, scoped, tag = 'input window, operand 0, single buffered']
    #allocation3 [shape = 's32[1]{0}', space=sflag, size = 0x4, scoped, tag = 'scoped memory for tpu_custom_call.1']
    #allocation4 [shape = 's32[1]{0}', space=sflag, size = 0x4, scoped, tag = 'scoped memory for tpu_custom_call.1']
    #allocation5 [shape = 'u8[8192]{0}', space=vmem, size = 0x2000, scoped, tag = 'output window, operand 0, single buffered']
    %6 = vsyncpa [#allocation3], 0
    %7 = vsyncpa [#allocation4], 0
    // Predicated region
    $region2: #{tpu_custom_call.1} parent=1 // pred_check
      _
    $region3: #{tpu_custom_call.1} parent=1 // pred_check_branch
      %9 = sbr.rel (0) target = $region5
    $region4: #{tpu_custom_call.1} parent=1 // pred_region
      %s11 = ssub.s32 256, 256
      %12 = vsyncadd [#allocation3], %s11
      %s14 = sshll.u32 [#allocation2], 4
      %s15 = int_to_ptr.vmem [resolvable:$true] %s14
      %17 = dma.hbm_to_vmem [thread:$0]  %s0, 256, %s15, [#allocation3]
    $region5: #{tpu_custom_call.1} parent=1 // pred_fallthru
      _
    // Predicated region
    $region6: #{tpu_custom_call.1} parent=1 // pred_check
      _
    $region7: #{tpu_custom_call.1} parent=1 // pred_check_branch
      %19 = sbr.rel (0) target = $region9
    $region8: #{tpu_custom_call.1} parent=1 // pred_region
      %20 = dma.done [#allocation3], 256
    $region9: #{tpu_custom_call.1} parent=1 // pred_fallthru
      _
    %v21 = vld [vmem:[#allocation2] sm:$0xff]
    %v22 = vld [vmem:[#allocation2 + $0x8] sm:$0xff]
    %v23 = vmul.f32 %v21, %v21
    %v24 = vmul.f32 %v22, %v22
    %v25 = vadd.f32 %v23, 1.0
    %v26 = vadd.f32 %v24, 1.0
    %v27 = vrsqrt.pop %v25
    %v28 = vrsqrt.pop %v26
    %v29 = vrsqrt.pop %v27
    %v30 = vmul.f32 %v27, %v29
    %vm31 = vcmp.eq.f32.partialorder %v27, inf
    %v32 = vsel %vm31, %v27, %v30
    %vm33 = vcmp.eq.f32.partialorder %v27, 0.0
    %v34 = vand.u32 %v27, 2147483648
    %v35 = vsel %vm33, %v34, %v32
    %v36 = vrsqrt.pop %v28
    %v37 = vmul.f32 %v28, %v36
    %vm38 = vcmp.eq.f32.partialorder %v28, inf
    %v39 = vsel %vm38, %v28, %v37
    %vm40 = vcmp.eq.f32.partialorder %v28, 0.0
    %v41 = vand.u32 %v28, 2147483648
    %v42 = vsel %vm40, %v41, %v39
    %v43 = vmul.f32 %v27, %v35
    %v44 = vmul.f32 %v28, %v42
    %v45 = vmul.f32 %v21, %v43
    %v46 = vmul.f32 %v22, %v44
    %47 = vst [vmem:[#allocation5] sm:$0xff] %v45
    %48 = vst [vmem:[#allocation5 + $0x8] sm:$0xff] %v46
    // Predicated region
    $region10: #{tpu_custom_call.1} parent=1 // pred_check
      _
    $region11: #{tpu_custom_call.1} parent=1 // pred_check_branch
      %50 = sbr.rel (0) target = $region13
    $region12: #{tpu_custom_call.1} parent=1 // pred_region
      %s52 = ssub.s32 256, 256
      %53 = vsyncadd [#allocation4], %s52
      %s55 = sshll.u32 [#allocation5], 4
      %s56 = int_to_ptr.vmem [resolvable:$true] %s55
      %58 = dma.vmem_to_hbm [thread:$0]  %s56, 256, %s1, [#allocation4]
    $region13: #{tpu_custom_call.1} parent=1 // pred_fallthru
      _
    // Predicated region
    $region14: #{tpu_custom_call.1} parent=1 // pred_check
      _
    $region15: #{tpu_custom_call.1} parent=1 // pred_check_branch
      %60 = sbr.rel (0) target = $region17
    $region16: #{tpu_custom_call.1} parent=1 // pred_region
      %61 = dma.done [#allocation4], 256
    $region17: #{tpu_custom_call.1} parent=1 // pred_fallthru
      _
    %62 = vsyncpa [#allocation3], 1
    %63 = vsyncpa [#allocation4], 1

</llo_original>
